<compile_context>
chip_gen: v5e
topology: v5e:2x2
jax: 0.10.0
libtpu: 0.0.40
codegen_flags: <defaults>
</compile_context>

<pallas_src>
from functools import partial

import jax
import jax.numpy as jnp
from jax.experimental import pallas as pl
from jax.experimental.pallas import tpu as pltpu

NEG_INF = -1e30


def _round_up(x: int, m: int) -> int:
    return (x + m - 1) // m * m


def top1_gating_kernel(pooled_ref, w_ref, b_ref, out_ref):
    # pooled_ref: (TB, H)     bf16   (pipelined, double-buffered)
    # w_ref:      (H, E_PAD)  bf16   (resident, single-buffered)
    # b_ref:      (1, E_PAD)  f32    (resident, single-buffered; padded lanes = -1e30)
    # out_ref:    (TB, E_PAD) f32    lanes [0, E): softmax probs,
    #                                lane E_PAD-1: top-1 expert index (as f32)
    logits = jnp.dot(pooled_ref[...], w_ref[...],
                     preferred_element_type=jnp.float32) + b_ref[...]

    # Row max (shared between the softmax and the fused argmax).
    m = jnp.max(logits, axis=-1, keepdims=True)

    # Fused top-1 expert index (first occurrence -> matches torch.argmax).
    e_pad = logits.shape[-1]
    lane = jax.lax.broadcasted_iota(jnp.int32, logits.shape, 1)
    top1 = jnp.min(jnp.where(logits == m, lane, jnp.int32(e_pad)),
                   axis=-1, keepdims=True)                      # (TB, 1)

    # Numerically-stable softmax, exact divide (F.softmax parity), all f32.
    e = jnp.exp(logits - m)                                     # padded lanes -> 0
    denom = jnp.sum(e, axis=-1, keepdims=True)
    probs = e / denom

    # Pack the index into the last padded lane -> single lane-dense 128-wide
    # store (no masked vst.msk / tiny per-step DMA for a (TB, 1) output).
    out_ref[...] = jnp.where(lane == e_pad - 1, top1.astype(jnp.float32), probs)


@partial(jax.jit, static_argnames=("block_b",))
def top1_gating(last_hidden_state, w_gate, b_gate, *, block_b: int = 1024):
    """Fused gate: CLS-pool -> linear -> softmax (+ fused top-1 index).

    last_hidden_state: (B, S, H) f32
    w_gate:            (E, H)    f32   (nn.Linear weight)
    b_gate:            (E,)      f32   (nn.Linear bias)
    returns: probs (B, E) f32, top1 (B,) i32
    """
    B, S, H = last_hidden_state.shape
    E = w_gate.shape[0]
    # Lane-dense expert dim; reserve >= 1 padded lane for the packed top-1 index.
    E_PAD = _round_up(E + 1, 128)

    # CLS pooling hoisted out of the kernel; slice + bf16 cast + pad fuse under
    # jit so only ~B*H*2 bytes of pooled activations ever cross HBM->VMEM.
    pooled = last_hidden_state[:, 0, :].astype(jnp.bfloat16)    # (B, H)

    # ---- Batch tile selection -------------------------------------------------
    # Big tile (amortize ~0.35us/grid-step, fill the 256-row MXU M dim), multiple
    # of 16 (bf16 sublane packing), capped by a conservative VMEM budget that is
    # safe on v7x (64 MiB physical) as well as v5e/v6e.
    b16 = _round_up(B, 16)
    per_row = 2 * (H * 2) + 2 * (E_PAD * 4)       # 2x-buffered pooled(bf16) + out(f32)
    resident = H * E_PAD * 2 + E_PAD * 4          # single-buffered weights + bias
    VMEM_BUDGET = 24 << 20
    cap = max(16, ((VMEM_BUDGET - resident) // per_row) // 16 * 16)
    TB = min(_round_up(block_b, 16), b16, cap)
    if b16 >= 256:
        # Guarantee >= 2 grid steps for large batches so the "parallel" axis can
        # shard across both v7x TensorCores (negligible cost on 1-TC chips).
        TB = min(TB, _round_up(-(-b16 // 2), 16))

    B_pad = _round_up(B, TB)
    if B_pad != B:
        pooled = jnp.pad(pooled, ((0, B_pad - B), (0, 0)))

    # Pad gate params: zero weight columns + -1e30 bias in padded lanes so the
    # softmax assigns them exactly zero probability mass.
    w_pad = jnp.zeros((H, E_PAD), jnp.bfloat16).at[:, :E].set(
        w_gate.T.astype(jnp.bfloat16))
    b_pad = jnp.full((1, E_PAD), NEG_INF, jnp.float32).at[0, :E].set(
        b_gate.astype(jnp.float32))

    grid = (B_pad // TB,)
    vmem_need = resident + TB * per_row
    vmem_limit = max(vmem_need + (8 << 20), 32 << 20)   # <= ~34 MiB by budget; v7x-safe

    cost = pl.CostEstimate(
        flops=2 * B_pad * H * E_PAD,
        transcendentals=B_pad * (E_PAD + 1),            # exp per lane + per-row divide
        bytes_accessed=(B_pad * H * 2                   # pooled (bf16)
                        + H * E_PAD * 2                 # weights (bf16)
                        + E_PAD * 4                     # bias (f32)
                        + B_pad * E_PAD * 4))           # packed probs/top1 out (f32)

    out = pl.pallas_call(
        top1_gating_kernel,
        out_shape=jax.ShapeDtypeStruct((B_pad, E_PAD), jnp.float32),
        grid=grid,
        in_specs=[
            pl.BlockSpec((TB, H), lambda i: (i, 0)),             # pooled rows, pipelined
            pl.BlockSpec((H, E_PAD), lambda i: (0, 0),
                         pipeline_mode=pl.Buffered(1)),          # weights, resident
            pl.BlockSpec((1, E_PAD), lambda i: (0, 0),
                         pipeline_mode=pl.Buffered(1)),          # bias, resident
        ],
        out_specs=pl.BlockSpec((TB, E_PAD), lambda i: (i, 0)),   # lane-dense slab
        compiler_params=pltpu.CompilerParams(
            dimension_semantics=("parallel",),                   # dual-TC on v7x
            vmem_limit_bytes=vmem_limit),
        cost_estimate=cost,
    )(pooled, w_pad, b_pad)

    probs = out[:B, :E]
    top1 = out[:B, E_PAD - 1].astype(jnp.int32)
    return probs, top1


def fake_llama_last_hidden_state(input_ids, embed_table):
    """Glue standing in for the Llama feature extractor (see TODO above)."""
    return embed_table[input_ids]                 # (B, S, H)


if __name__ == "__main__":
    # Small shapes consistent with the module's forward:
    #   batch=2, seq=8, hidden_size=32, num_experts=4, vocab=64
    B, S, H, E, V = 2, 8, 32, 4, 64

    key = jax.random.PRNGKey(0)
    k_emb, k_w, k_b, k_ids = jax.random.split(key, 4)

    # Deterministic "parameters"
    embed_table = jax.random.normal(k_emb, (V, H), dtype=jnp.float32) * 0.02
    # nn.Linear(hidden_size, num_experts): weight (E, H), bias (E,)
    w_gate = jax.random.normal(k_w, (E, H), dtype=jnp.float32) * 0.1
    b_gate = jax.random.normal(k_b, (E,), dtype=jnp.float32) * 0.1

    # Deterministic example input_ids
    input_ids = jax.random.randint(k_ids, (B, S), 0, V, dtype=jnp.int32)

    # "Backbone" features (glue, plain JAX)
    last_hidden_state = fake_llama_last_hidden_state(input_ids, embed_table)

    # Kernel: CLS-pool (hoisted) + gate linear + softmax + fused top-1 index
    probs, top1 = top1_gating(last_hidden_state, w_gate, b_gate)
    probs = jax.block_until_ready(probs)
    top1 = jax.block_until_ready(top1)

    # --- Reference checks (plain JAX) ---
    pooled_ref = last_hidden_state[:, 0, :]

    # Full-precision reference (module semantics).
    logits_f32 = pooled_ref @ w_gate.T + b_gate
    probs_f32 = jax.nn.softmax(logits_f32, axis=-1)

    # bf16-matched reference (same matmul precision as the kernel).
    logits_bf = jnp.dot(pooled_ref.astype(jnp.bfloat16),
                        w_gate.T.astype(jnp.bfloat16),
                        preferred_element_type=jnp.float32) + b_gate
    probs_bf = jax.nn.softmax(logits_bf, axis=-1)

    assert probs.shape == (B, E)
    assert top1.shape == (B,)
    assert jnp.allclose(probs, probs_bf, atol=2e-3), "mismatch vs bf16 reference"
    assert jnp.allclose(probs, probs_f32, atol=5e-2), "mismatch vs f32 reference"
    assert jnp.allclose(jnp.sum(probs, axis=-1), 1.0, atol=1e-3)
    # Fused top-1 index must agree with the kernel's own probabilities.
    assert jnp.all(top1 == jnp.argmax(probs, axis=-1)), "top-1 index mismatch"

    print("KERNEL_OK")
</pallas_src>

<mosaic_0001>
module attributes {stable_mosaic.version = 11 : i64} {
  func.func @top1_gating_kernel(%arg0: i32, %arg1: memref<16x32xbf16, #tpu.memory_space<vmem>>, %arg2: memref<32x128xbf16, #tpu.memory_space<vmem>>, %arg3: memref<1x128xf32, #tpu.memory_space<vmem>>, %arg4: memref<16x128xf32, #tpu.memory_space<vmem>>) attributes {dimension_semantics = [#tpu.dimension_semantics<parallel>], iteration_bounds = array<i64: 1>, scalar_prefetch = 0 : i64, scratch_operands = 0 : i64, tpu.core_type = #tpu.core_type<tc>, window_params = [{transform_indices = @transform_0, window_bounds = array<i64: 16, 32>}, {pipeline_mode = #tpu.pipeline_mode<synchronous>, transform_indices = @transform_1, window_bounds = array<i64: 32, 128>}, {pipeline_mode = #tpu.pipeline_mode<synchronous>, transform_indices = @transform_2, window_bounds = array<i64: 1, 128>}, {transform_indices = @transform_3, window_bounds = array<i64: 16, 128>}]} {
    %c0 = arith.constant 0 : index
    %c0_0 = arith.constant 0 : index
    %0 = vector.load %arg1[%c0, %c0_0] : memref<16x32xbf16, #tpu.memory_space<vmem>>, vector<16x32xbf16>
    %c0_1 = arith.constant 0 : index
    %c0_2 = arith.constant 0 : index
    %1 = vector.load %arg2[%c0_1, %c0_2] : memref<32x128xbf16, #tpu.memory_space<vmem>>, vector<32x128xbf16>
    %cst = arith.constant dense<0.000000e+00> : vector<16x128xf32>
    %2 = tpu.matmul %0, %1, %cst {dimension_numbers = #tpu.dot_dimension_numbers<[1], [0], [0], [1], [0, 0, 1, 1], [], []>} : vector<16x32xbf16>, vector<32x128xbf16>, vector<16x128xf32> -> vector<16x128xf32>
    %c0_3 = arith.constant 0 : index
    %c0_4 = arith.constant 0 : index
    %3 = vector.load %arg3[%c0_3, %c0_4] : memref<1x128xf32, #tpu.memory_space<vmem>>, vector<1x128xf32>
    %4 = vector.broadcast %3 : vector<1x128xf32> to vector<16x128xf32>
    %5 = arith.addf %2, %4 : vector<16x128xf32>
    %cst_5 = arith.constant dense<0xFF800000> : vector<16xf32>
    %6 = vector.multi_reduction <maximumf>, %5, %cst_5 [1] : vector<16x128xf32> to vector<16xf32>
    %7 = vector.shape_cast %6 : vector<16xf32> to vector<16x1xf32>
    %8 = tpu.iota {dimensions = array<i32: 1>} : vector<16x128xi32>
    %9 = vector.broadcast %7 : vector<16x1xf32> to vector<16x128xf32>
    %10 = arith.cmpf oeq, %5, %9 : vector<16x128xf32>
    %c128_i32 = arith.constant 128 : i32
    %11 = vector.broadcast %c128_i32 : i32 to vector<16x128xi32>
    %12 = arith.select %10, %8, %11 : vector<16x128xi1>, vector<16x128xi32>
    %cst_6 = arith.constant dense<2147483647> : vector<16xi32>
    %13 = vector.multi_reduction <minsi>, %12, %cst_6 [1] : vector<16x128xi32> to vector<16xi32>
    %14 = vector.shape_cast %13 : vector<16xi32> to vector<16x1xi32>
    %15 = vector.broadcast %7 : vector<16x1xf32> to vector<16x128xf32>
    %16 = arith.subf %5, %15 : vector<16x128xf32>
    %17 = math.exp %16 : vector<16x128xf32>
    %cst_7 = arith.constant dense<0.000000e+00> : vector<16xf32>
    %18 = vector.multi_reduction <add>, %17, %cst_7 [1] : vector<16x128xf32> to vector<16xf32>
    %19 = vector.shape_cast %18 : vector<16xf32> to vector<16x1xf32>
    %20 = vector.broadcast %19 : vector<16x1xf32> to vector<16x128xf32>
    %21 = arith.divf %17, %20 : vector<16x128xf32>
    %c127_i32 = arith.constant 127 : i32
    %22 = vector.broadcast %c127_i32 : i32 to vector<16x128xi32>
    %23 = arith.cmpi eq, %8, %22 : vector<16x128xi32>
    %24 = arith.sitofp %14 : vector<16x1xi32> to vector<16x1xf32>
    %25 = vector.shape_cast %24 : vector<16x1xf32> to vector<16x1xf32>
    %26 = vector.broadcast %25 : vector<16x1xf32> to vector<16x128xf32>
    %27 = arith.select %23, %26, %21 : vector<16x128xi1>, vector<16x128xf32>
    %c0_8 = arith.constant 0 : index
    %c0_9 = arith.constant 0 : index
    %28 = vector.load %arg4[%c0_8, %c0_9] : memref<16x128xf32, #tpu.memory_space<vmem>>, vector<16x128xf32>
    tpu.vector_store %arg4[%c0_8, %c0_9], %27 {strides = array<i32>} : memref<16x128xf32, #tpu.memory_space<vmem>>, vector<16x128xf32>,
    return
  }
  func.func @transform_0(%arg0: i32) -> (i32, i32) {
    %c0_i32 = arith.constant 0 : i32
    %c0_i32_0 = arith.constant 0 : i32
    return %arg0, %c0_i32 : i32, i32
  }
  func.func @transform_1(%arg0: i32) -> (i32, i32) {
    %c0_i32 = arith.constant 0 : i32
    %c0_i32_0 = arith.constant 0 : i32
    %c0_i32_1 = arith.constant 0 : i32
    return %c0_i32, %c0_i32_0 : i32, i32
  }
  func.func @transform_2(%arg0: i32) -> (i32, i32) {
    %c0_i32 = arith.constant 0 : i32
    %c0_i32_0 = arith.constant 0 : i32
    %c0_i32_1 = arith.constant 0 : i32
    return %c0_i32, %c0_i32_0 : i32, i32
  }
  func.func @transform_3(%arg0: i32) -> (i32, i32) {
    %c0_i32 = arith.constant 0 : i32
    %c0_i32_0 = arith.constant 0 : i32
    return %arg0, %c0_i32 : i32, i32
  }
}

</mosaic_0001>

<llo_original>
// kernel: top1_gating.1
$region0: #{top1_gating.1}
  #allocation0 [shape = 'u32[]', space=smem, size = 0x4, offset = 0x4, fixed_abs, tag = 'smem constant byte address 0x4 - core index']
  #allocation1 [shape = 'u32[72,128]{1,0:T(1,128)}', space=vmem, size = 0x9000, scoped, tag = 'internal scratch']
  %s0 = inlined_call_operand.vmem [shape: bf16[16,32], index: 0, kind: input, shape index: {}]
  %s1 = inlined_call_operand.vmem [shape: bf16[32,128], index: 1, kind: input, shape index: {}]
  %s2 = inlined_call_operand.vmem [shape: f32[1,128], index: 2, kind: input, shape index: {}]
  %s3 = inlined_call_operand.vmem [shape: f32[16,128], index: 3, kind: output, shape index: {}]
  %s4 = sld [smem:[#allocation0]]
  $region22: #{top1_gating.1} parent=0
    _
  %s6 = ssub.s32 1, %s4
  %s7 = scalar_select 0, %s6, %s4
  // Predicated region
  $region2: #{top1_gating.1} parent=0 // pred_check
    _
  $region3: #{top1_gating.1} parent=0 // pred_check_branch
    %9 = sbr.rel (0) target = $region5
  $region4: #{top1_gating.1} parent=0 // pred_region
    _
  $region5: #{top1_gating.1} parent=0 // pred_fallthru
    _
  // Predicated region
  $region6: #{top1_gating.1} parent=0 // pred_check
    _
  $region7: #{top1_gating.1} parent=0 // pred_check_branch
    %11 = sbr.rel (0) target = $region9
  $region8: #{top1_gating.1} parent=0 // pred_region
    _
  $region9: #{top1_gating.1} parent=0 // pred_fallthru
    _
  // Predicated region
  $region10: #{top1_gating.1} parent=0 // pred_check
    _
  $region11: #{top1_gating.1} parent=0 // pred_check_branch
    %13 = sbr.rel (0) target = $region13
  $region12: #{top1_gating.1} parent=0 // pred_region
    _
  $region13: #{top1_gating.1} parent=0 // pred_fallthru
    _
  %v15 = vld [vmem:[%s0] sm:$0xf]
  %v16 = vld [vmem:[%s0 + $0x4] sm:$0xf]
  %v17 = vld [vmem:[%s1] sm:$0xf]
  %v18 = vld [vmem:[%s1 + $0x4] sm:$0xf]
  %v19 = vld [vmem:[%s1 + $0x8] sm:$0xf]
  %v20 = vld [vmem:[%s1 + $0xc] sm:$0xf]
  %v21 = vld [vmem:[%s2] sm:$0x1]
  %v23 = vperm.slane %v21, 0
  %v27 = vunpack.c.l.b16 %v15
  %v28 = vunpack.c.l.b16 %v16
  %v29 = vpack.c.b16 %v28, %v27
  %v34 = vunpack.c.l.b16 %v17
  %v35 = vunpack.c.l.b16 %v18
  %v36 = vunpack.c.l.b16 %v19
  %v37 = vunpack.c.l.b16 %v20
  %v38 = vpack.c.b16 %v35, %v34
  %v39 = vpack.c.b16 %v37, %v36
  %vm42 = vcmask 261120
  %v44 = vsel %vm42, %v29, 0
  %46 = vmatpush.bf16.msra.mxu0 0
  %47 = vmatpush.bf16.msra.mxu0 0
  %48 = vmatpush.bf16.msra.mxu0 0
  %49 = vmatpush.bf16.msra.mxu0 0
  %50 = vmatpush.bf16.msra.mxu0 0
  %51 = vmatpush.bf16.msra.mxu0 0
  %52 = vmatpush.bf16.msra.mxu0 %v39
  %53 = vmatpush.bf16.msra.mxu0 %v38
  %54 = vmatmul.bf16.gmra.mxu0 %v44
  %v55 = vpop.f32.mrf.mxu0
  %v56 = vadd.f32 %v23, %v55
  %v57 = vpop.f32.mrf.mxu0
  %v58 = vadd.f32 %v23, %v57
  %59 = vdwg.mxu0
  %60 = vmax.xlane.f32.xlu0 %v56
  %v61 = vpop.xlane.xlu0 %60
  %62 = vmax.xlane.f32.xlu0 %v58
  %v63 = vpop.xlane.xlu0 %62
  %v64 = vlaneseq
  %v65 = vand.u32 %v64, 127
  %vm66 = vcmp.eq.f32.partialorder %v56, %v61
  %vm67 = vcmp.eq.f32.partialorder %v58, %v63
  %v68 = vsel %vm66, %v65, 128
  %v69 = vsel %vm67, %v65, 128
  %v70 = vand.u32 %v68, 65535
  %v71 = vshra.s32 %v68, 16
  %v72 = vcvt.s32.f32 %v70
  %v73 = vcvt.s32.f32 %v71
  %74 = vmin.xlane.f32.xlu0 %v73
  %v75 = vpop.xlane.xlu0 %74
  %vm76 = vcmp.eq.f32.partialorder %v73, %v75
  %v77 = vsel %vm76, %v72, inf
  %78 = vmin.xlane.f32.xlu0 %v77
  %v79 = vpop.xlane.xlu0 %78
  %v80 = vcvt.f32.s32 %v79
  %v81 = vcvt.f32.s32 %v75
  %v82 = vshll.u32 %v81, 16
  %v83 = vadd.s32 %v82, %v80
  %v84 = vand.u32 %v69, 65535
  %v85 = vshra.s32 %v69, 16
  %v86 = vcvt.s32.f32 %v84
  %v87 = vcvt.s32.f32 %v85
  %88 = vmin.xlane.f32.xlu0 %v87
  %v89 = vpop.xlane.xlu0 %88
  %vm90 = vcmp.eq.f32.partialorder %v87, %v89
  %v91 = vsel %vm90, %v86, inf
  %92 = vmin.xlane.f32.xlu0 %v91
  %v93 = vpop.xlane.xlu0 %92
  %v94 = vcvt.f32.s32 %v93
  %v95 = vcvt.f32.s32 %v89
  %v96 = vshll.u32 %v95, 16
  %v97 = vadd.s32 %v96, %v94
  %v98 = vsub.f32 %v56, %v61
  %v99 = vsub.f32 %v58, %v63
  %v100 = vmul.f32 %v98, 1.442695
  %v101 = vpow.pop %v100
  %v102 = vmul.f32 %v99, 1.442695
  %v103 = vpow.pop %v102
  %104 = vadd.xlane.f32.xlu0 %v101
  %v105 = vpop.xlane.xlu0 %104
  %106 = vadd.xlane.f32.xlu0 %v103
  %v107 = vpop.xlane.xlu0 %106
  %v108 = vrcp.pop %v105
  %v109 = vmul.f32 %v105, %v108
  %v110 = vsub.f32 1.0, %v109
  %v111 = vmul.f32 %v108, %v110
  %v112 = vadd.f32 %v108, %v111
  %vm113 = vweird.f32 %v105
  %vm114 = vweird.f32 %v108
  %vm115 = vmor %vm113, %vm114
  %v116 = vsel %vm115, %v108, %v112
  %v117 = vand.u32 2147483647, %v105
  %vm118 = vcmp.eq.f32.partialorder %v117, 8.507059e+37
  %v119 = vand.u32 %v105, 2147483648
  %v120 = vor.u32 1.1754944e-38, %v119
  %v121 = vsel %vm118, %v120, %v116
  %v122 = vmul.f32 %v101, %v121
  %v123 = vrcp.pop %v107
  %v124 = vmul.f32 %v107, %v123
  %v125 = vsub.f32 1.0, %v124
  %v126 = vmul.f32 %v123, %v125
  %v127 = vadd.f32 %v123, %v126
  %vm128 = vweird.f32 %v107
  %vm129 = vweird.f32 %v123
  %vm130 = vmor %vm128, %vm129
  %v131 = vsel %vm130, %v123, %v127
  %v132 = vand.u32 2147483647, %v107
  %vm133 = vcmp.eq.f32.partialorder %v132, 8.507059e+37
  %v134 = vand.u32 %v107, 2147483648
  %v135 = vor.u32 1.1754944e-38, %v134
  %v136 = vsel %vm133, %v135, %v131
  %v137 = vmul.f32 %v103, %v136
  %vm138 = vcmp.eq.s32.totalorder %v65, 127
  %v139 = vcvt.s32.f32 %v83
  %v140 = vcvt.s32.f32 %v97
  %v141 = vsel %vm138, %v139, %v122
  %v142 = vsel %vm138, %v140, %v137
  %143 = vst [vmem:[%s3] sm:$0xff] %v141
  %144 = vst [vmem:[%s3 + $0x8] sm:$0xff] %v142
  // Predicated region
  $region14: #{top1_gating.1} parent=0 // pred_check
    _
  $region15: #{top1_gating.1} parent=0 // pred_check_branch
    %146 = sbr.rel (0) target = $region17
  $region16: #{top1_gating.1} parent=0 // pred_region
    _
  $region17: #{top1_gating.1} parent=0 // pred_fallthru
    _
  // Predicated region
  $region18: #{top1_gating.1} parent=0 // pred_check
    _
  $region19: #{top1_gating.1} parent=0 // pred_check_branch
    %148 = sbr.rel (0) target = $region21
  $region20: #{top1_gating.1} parent=0 // pred_region
    _
  $region21: #{top1_gating.1} parent=0 // pred_fallthru
    _

</llo_original>
